<compile_context>
chip_gen: v6e
topology: v6e:2x2x1
jax: 0.10.0
libtpu: 0.0.40
codegen_flags: <defaults>
</compile_context>

<pallas_src>
from functools import partial

import numpy as np

import jax
import jax.numpy as jnp
from jax.experimental import pallas as pl
from jax.experimental.pallas import tpu as pltpu

SUB, LANE = 8, 128  # one aligned (sublane, lane) int32 tile = one vreg


def _encode(s: str) -> jnp.ndarray:
    """Encode a python string into a (SUB, LANE) int32 codepoint tile (row 0)."""
    cps = np.array([ord(c) for c in s], dtype=np.int32)
    assert cps.size <= LANE, "string too long for a single lane tile"
    buf = np.zeros((SUB, LANE), dtype=np.int32)
    buf[0, : cps.size] = cps
    return jnp.asarray(buf)


def _decode(tile_np: np.ndarray) -> str:
    """Decode row 0 of a codepoint tile.

    NOTE: codepoint 0 acts as a terminator, so phrases containing '\\0' would
    be truncated — acceptable for this mock (plain-text phrases only).
    """
    row = np.asarray(tile_np)[0]
    zeros = np.flatnonzero(row == 0)
    n = int(zeros[0]) if zeros.size else int(row.size)
    return "".join(map(chr, row[:n].tolist()))


def _concat_kernel(role_ref, phrase_ref, out_ref, *, shift: int):
    # Static lane rotate of the phrase by `shift` (toward higher lane indices,
    # jnp.roll semantics), then OR with the role prefix.  The host-side assert
    # prefix_len + phrase_len <= LANE guarantees that:
    #   * role lanes >= shift are zero, and
    #   * wrapped-around phrase lanes < shift are zero,
    # so a single vor reproduces the masked select exactly.
    shifted = pltpu.roll(phrase_ref[...], shift=shift, axis=1)
    out_ref[...] = role_ref[...] | shifted


@partial(jax.jit, static_argnums=0)
def mock_model_forward(shift: int, role_codes, phrase_codes):
    """Concatenate role/phrase codepoint tiles on-TPU. `shift` is a Python
    static (prefix length) — one compile per prefix length, which is fine
    because the kernel runs exactly once per model instance."""
    return pl.pallas_call(
        partial(_concat_kernel, shift=shift),
        out_shape=jax.ShapeDtypeStruct((SUB, LANE), jnp.int32),
        in_specs=[
            pl.BlockSpec(memory_space=pltpu.MemorySpace.VMEM),
            pl.BlockSpec(memory_space=pltpu.MemorySpace.VMEM),
        ],
        out_specs=pl.BlockSpec(memory_space=pltpu.MemorySpace.VMEM),
    )(role_codes, phrase_codes)


class MockTokenizerJAX:
    """Faithful port of MockTokenizer (incl. its quirks: the role tag gets
    double-wrapped and '\\n'.join is applied to a string, per the reference).
    Unused by forward(), kept for parity."""

    def __init__(self):
        self.role_expr = "<|mock-{role}|>"

    def apply_chat_template(self, messages, **kwargs):
        prompt = ""
        for m in messages:
            role = self.role_expr.format(role=m["role"])
            content = m["content"]
            prompt += f"<|mock-{role}|> {content}\n"
        return "\n".join(prompt)


class MockModelJAX:
    """JAX/Pallas port of MockModel. forward(messages) ignores `messages`
    (exactly like the PyTorch reference) and returns f'{role_tag} {phrase}'.
    The concatenation is executed once on-TPU at __init__ and cached, since
    both operands and the output are constants -> steady-state forward() does
    no device work at all."""

    def __init__(self, phrase: str):
        self.tokenizer = MockTokenizerJAX()
        self.phrase = phrase

        # TODO(synk): the chat-template / f-string formatting is host-side
        # string handling with no tensor/Pallas equivalent; only the codepoint
        # concatenation below runs on-TPU.
        self._role_tag = self.tokenizer.role_expr.format(role="assistant")
        prefix = self._role_tag + " "
        # This assert is load-bearing: it guarantees the OR in the kernel is
        # equivalent to the masked select (no wrap-around corruption).
        assert len(prefix) + len(self.phrase) <= LANE, (
            "prefix + phrase exceed one 128-lane tile"
        )
        self._role_codes = _encode(prefix)
        self._phrase_codes = _encode(self.phrase)
        self._shift = len(prefix)

        # Run the gridless kernel ONCE; cache the decoded result.
        self._out_tile = mock_model_forward(
            self._shift, self._role_codes, self._phrase_codes
        )
        # device_get synchronizes; no separate block_until_ready needed here.
        self._cached_output = _decode(jax.device_get(self._out_tile))

    def __call__(self, messages):
        return self.forward(messages)

    def forward(self, messages):
        # Reference forward ignores `messages`; return the cached constant.
        return self._cached_output


if __name__ == "__main__":
    # Deterministic example input. The reference forward ignores `messages`;
    # the PRNGKey(0) tensor mirrors "example inputs" and is unused.
    key = jax.random.PRNGKey(0)
    _unused = jax.random.normal(key, (2, 4))

    messages = [
        {"role": "system", "content": "You are a mock."},
        {"role": "user", "content": "Say something."},
    ]

    phrase = "Hello from the mock model!"
    model = MockModelJAX(phrase)  # the kernel ran exactly once here

    # Block on the device result produced at __init__ (no duplicate launch).
    jax.block_until_ready(model._out_tile)

    result = model(messages)
    expected = f"{model._role_tag} {phrase}"
    assert result == expected, f"mismatch: {result!r} != {expected!r}"
    assert _decode(jax.device_get(model._out_tile)) == expected

    print("KERNEL_OK")
</pallas_src>

<mosaic_0001>
module attributes {stable_mosaic.version = 11 : i64} {
  func.func @_concat_kernel(%arg0: memref<8x128xi32, #tpu.memory_space<vmem>>, %arg1: memref<8x128xi32, #tpu.memory_space<vmem>>, %arg2: memref<8x128xi32, #tpu.memory_space<vmem>>) attributes {dimension_semantics = [], scalar_prefetch = 0 : i64, scratch_operands = 0 : i64, tpu.core_type = #tpu.core_type<tc>} {
    %c0 = arith.constant 0 : index
    %c0_0 = arith.constant 0 : index
    %0 = vector.load %arg1[%c0, %c0_0] : memref<8x128xi32, #tpu.memory_space<vmem>>, vector<8x128xi32>
    %c19_i32 = arith.constant 19 : i32
    %1 = tpu.dynamic_rotate %0 by %c19_i32 dim 1 : vector<8x128xi32>, i32 -> vector<8x128xi32>
    %c0_1 = arith.constant 0 : index
    %c0_2 = arith.constant 0 : index
    %2 = vector.load %arg0[%c0_1, %c0_2] : memref<8x128xi32, #tpu.memory_space<vmem>>, vector<8x128xi32>
    %3 = arith.ori %2, %1 : vector<8x128xi32>
    %c0_3 = arith.constant 0 : index
    %c0_4 = arith.constant 0 : index
    %4 = vector.load %arg2[%c0_3, %c0_4] : memref<8x128xi32, #tpu.memory_space<vmem>>, vector<8x128xi32>
    tpu.vector_store %arg2[%c0_3, %c0_4], %3 {strides = array<i32>} : memref<8x128xi32, #tpu.memory_space<vmem>>, vector<8x128xi32>,
    return
  }
}

</mosaic_0001>

<llo_original>
// kernel: mock_model_forward.1
$region0: #{mock_model_forward.1}
  #allocation0 [shape = 'u32[]', space=smem, size = 0x4, offset = 0x4, fixed_abs, tag = 'smem constant byte address 0x4 - core index']
  #allocation1 [shape = 'u32[144,128]{1,0:T(1,128)}', space=vmem, size = 0x12000, scoped, tag = 'internal scratch']
  %s0 = inlined_call_operand.hbm [shape: s32[8,128], index: 0, kind: input, shape index: {}]
  %s1 = inlined_call_operand.hbm [shape: s32[8,128], index: 1, kind: input, shape index: {}]
  %s2 = inlined_call_operand.hbm [shape: s32[8,128], index: 2, kind: output, shape index: {}]
  %s3 = sld [smem:[#allocation0]]
  $region26: #{mock_model_forward.1} parent=0
    _
  %s5 = ssub.s32 1, %s3
  %s6 = scalar_select 0, %s5, %s3
  $region1: #{mock_model_forward.1} parent=0
    #allocation2 [shape = 'u8[4096]{0}', space=vmem, size = 0x1000, scoped, tag = 'input window, operand 0, single buffered']
    #allocation3 [shape = 's32[1]{0}', space=sflag, size = 0x4, scoped, tag = 'scoped memory for mock_model_forward.1']
    #allocation4 [shape = 's32[1]{0}', space=sflag, size = 0x4, scoped, tag = 'scoped memory for mock_model_forward.1']
    #allocation5 [shape = 'u8[4096]{0}', space=vmem, size = 0x1000, scoped, tag = 'input window, operand 1, single buffered']
    #allocation6 [shape = 's32[1]{0}', space=sflag, size = 0x4, scoped, tag = 'scoped memory for mock_model_forward.1']
    #allocation7 [shape = 'u8[4096]{0}', space=vmem, size = 0x1000, scoped, tag = 'output window, operand 0, single buffered']
    %7 = vsyncpa [#allocation3], 0
    %8 = vsyncpa [#allocation6], 0
    %9 = vsyncpa [#allocation4], 0
    // Predicated region
    $region2: #{mock_model_forward.1} parent=1 // pred_check
      _
    $region3: #{mock_model_forward.1} parent=1 // pred_check_branch
      %11 = sbr.rel (0) target = $region5
    $region4: #{mock_model_forward.1} parent=1 // pred_region
      %s13 = ssub.s32 128, 128
      %14 = vsyncadd [#allocation3], %s13
      %s16 = sshll.u32 [#allocation2], 4
      %s17 = int_to_ptr.vmem [resolvable:$true] %s16
      %19 = dma.hbm_to_vmem [thread:$0]  %s0, 128, %s17, [#allocation3]
    $region5: #{mock_model_forward.1} parent=1 // pred_fallthru
      _
    // Predicated region
    $region6: #{mock_model_forward.1} parent=1 // pred_check
      _
    $region7: #{mock_model_forward.1} parent=1 // pred_check_branch
      %21 = sbr.rel (0) target = $region9
    $region8: #{mock_model_forward.1} parent=1 // pred_region
      %s23 = ssub.s32 128, 128
      %24 = vsyncadd [#allocation6], %s23
      %s26 = sshll.u32 [#allocation5], 4
      %s27 = int_to_ptr.vmem [resolvable:$true] %s26
      %29 = dma.hbm_to_vmem [thread:$0]  %s1, 128, %s27, [#allocation6]
    $region9: #{mock_model_forward.1} parent=1 // pred_fallthru
      _
    // Predicated region
    $region10: #{mock_model_forward.1} parent=1 // pred_check
      _
    $region11: #{mock_model_forward.1} parent=1 // pred_check_branch
      %31 = sbr.rel (0) target = $region13
    $region12: #{mock_model_forward.1} parent=1 // pred_region
      %32 = dma.done [#allocation3], 128
    $region13: #{mock_model_forward.1} parent=1 // pred_fallthru
      _
    // Predicated region
    $region14: #{mock_model_forward.1} parent=1 // pred_check
      _
    $region15: #{mock_model_forward.1} parent=1 // pred_check_branch
      %34 = sbr.rel (0) target = $region17
    $region16: #{mock_model_forward.1} parent=1 // pred_region
      %35 = dma.done [#allocation6], 128
    $region17: #{mock_model_forward.1} parent=1 // pred_fallthru
      _
    %v36 = vld [vmem:[#allocation5] sm:$0xff]
    %37 = vrot.lane.b32.xlu0 %v36, 19
    %v38 = vpop.permute.xlu0 %37
    %v39 = vld [vmem:[#allocation2] sm:$0xff]
    %v40 = vor.u32 %v39, %v38
    %41 = vst [vmem:[#allocation7] sm:$0xff] %v40
    // Predicated region
    $region18: #{mock_model_forward.1} parent=1 // pred_check
      _
    $region19: #{mock_model_forward.1} parent=1 // pred_check_branch
      %43 = sbr.rel (0) target = $region21
    $region20: #{mock_model_forward.1} parent=1 // pred_region
      %s45 = ssub.s32 128, 128
      %46 = vsyncadd [#allocation4], %s45
      %s48 = sshll.u32 [#allocation7], 4
      %s49 = int_to_ptr.vmem [resolvable:$true] %s48
      %51 = dma.vmem_to_hbm [thread:$0]  %s49, 128, %s2, [#allocation4]
    $region21: #{mock_model_forward.1} parent=1 // pred_fallthru
      _
    // Predicated region
    $region22: #{mock_model_forward.1} parent=1 // pred_check
      _
    $region23: #{mock_model_forward.1} parent=1 // pred_check_branch
      %53 = sbr.rel (0) target = $region25
    $region24: #{mock_model_forward.1} parent=1 // pred_region
      %54 = dma.done [#allocation4], 128
    $region25: #{mock_model_forward.1} parent=1 // pred_fallthru
      _
    %55 = vsyncpa [#allocation3], 1
    %56 = vsyncpa [#allocation6], 1
    %57 = vsyncpa [#allocation4], 1

</llo_original>
